<compile_context>
chip_gen: v7x
topology: tpu7x:2x2x1
jax: 0.10.0
libtpu: 0.0.40
codegen_flags: <defaults>
</compile_context>

<pallas_src>
import functools

import numpy as np
import jax
import jax.numpy as jnp
from jax.experimental import pallas as pl
from jax.experimental.pallas import tpu as pltpu

# ---- sizes implied by the forward() slicing ---------------------------------
V = 105          # vertex feature (100 node cols + 5 tail cols)
E = 112          # edge feature   (109 edge cols + 3 tail cols)
OUT = 50         # graph_conv output size
DATA_DIM = 322   # 109 edge | 100 node1 | 100 node2 | 13 tail columns

# ---- lane-padded sizes (multiples of 128) ------------------------------------
VP = 128         # padded vertex lanes
KP = 2 * VP      # padded K for the fused block-diagonal second layer
NP = 128         # padded output lanes (real output = 2*OUT = 100)


def _round_up(x, m):
    return (x + m - 1) // m * m


def _route2stop_kernel(d_ref, w1_ref, b1_ref, w2_ref, b2_ref, out_ref):
    """One batch tile: folded-gather edge2vertex, gate, fused graph_conv."""
    d = d_ref[...]                                      # (tm, 322) f32
    tm = d.shape[0]

    # edge2vertex: the edge-column gather is folded into w1_big (zero rows for
    # non-edge columns), so this is a single (tm,322)x(322,128) MXU pass.
    e2v = jnp.dot(d, w1_ref[...], preferred_element_type=jnp.float32)
    e2v = jnp.maximum(e2v + b1_ref[...], 0.0)           # (tm,128); lanes 105:128 == 0

    # node1/node2: static lane slices + concat (tail cols live at 312:317 and
    # 317:322).  Padding lanes 105:128 are annihilated by e2v == 0 there and by
    # the zero rows of the block-diagonal W2.
    zpad = jnp.zeros((tm, VP - V), d.dtype)
    node1 = jnp.concatenate([d[:, 109:209], d[:, 312:317], zpad], axis=1)  # (tm,128)
    node2 = jnp.concatenate([d[:, 209:309], d[:, 317:322], zpad], axis=1)  # (tm,128)

    # Fused graph_conv: block-diagonal weight computes v_i and v_j in one
    # matmul; result is one lane-dense 128-wide store (cols 0:50 | 50:100).
    gated = jnp.concatenate([node1 * e2v, node2 * e2v], axis=1)            # (tm,256)
    y = jnp.dot(gated, w2_ref[...], preferred_element_type=jnp.float32)
    out_ref[...] = jnp.maximum(y + b2_ref[...], 0.0).astype(out_ref.dtype)


def prepare_params(w1, b1, w2, b2):
    """Build padded / fused kernel params ONCE at module-init time.

    w1: (E=112, V=105), w2: (V=105, OUT=50), stored [in, out] so y = x @ w + b.
      * w1 -> w1_big (322, 128): the 112 rows scattered to the data columns the
        edge gather would have read (cols 0:109 and 309:312); other rows zero,
        so `data_tile @ w1_big` == `edge @ w1` with the gather folded in.
      * w2 -> block-diagonal (256, 128) so v_i and v_j come from one matmul.
    Zero weight rows/cols + zero bias lanes make all padding mathematically
    inert (ReLU keeps padded output lanes exactly 0).
    """
    w1 = jnp.asarray(w1, jnp.float32)
    w2 = jnp.asarray(w2, jnp.float32)
    w1_big = (jnp.zeros((DATA_DIM, VP), jnp.float32)
              .at[0:109, :V].set(w1[0:109])
              .at[309:312, :V].set(w1[109:112]))
    b1p = jnp.zeros((1, VP), jnp.float32).at[:, :V].set(jnp.reshape(b1, (1, V)))
    w2b = (jnp.zeros((KP, NP), jnp.float32)
           .at[0:V, 0:OUT].set(w2)
           .at[VP:VP + V, OUT:2 * OUT].set(w2))
    b2b = (jnp.zeros((1, NP), jnp.float32)
           .at[:, 0:OUT].set(jnp.reshape(b2, (1, OUT)))
           .at[:, OUT:2 * OUT].set(jnp.reshape(b2, (1, OUT))))
    return w1_big, b1p, w2b, b2b


@functools.partial(jax.jit, static_argnames=("tile_m", "out_dtype"))
def route2stop_pallas(data, w1_big, b1p, w2b, b2b, *,
                      tile_m=1024, out_dtype=jnp.float32):
    """Returns (B, 128): lanes 0:50 = v_i, 50:100 = v_j, 100:128 exactly 0.

    The padded-lane layout is returned as-is so the consumer can read lanes
    0:100 without an extra full-output HBM copy for a lane-subset slice.
    """
    B, D = data.shape
    assert D == DATA_DIM

    # Tile selection: always a multiple of 8 (sublane rule), and keep at least
    # two grid steps so v7x's second TensorCore is not idle (no-op on v5e/v6e).
    tm = _round_up(max(int(tile_m), 8), 8)
    tm = min(tm, _round_up(pl.cdiv(B, 2), 8))
    grid = (pl.cdiv(B, tm),)   # ragged last block: Pallas masks OOB rows

    return pl.pallas_call(
        _route2stop_kernel,
        out_shape=jax.ShapeDtypeStruct((B, NP), out_dtype),
        grid_spec=pltpu.PrefetchScalarGridSpec(
            num_scalar_prefetch=0,
            grid=grid,
            in_specs=[
                # data: streamed one batch tile per grid step.
                # (If xprof shows exposed DMA, add pipeline_mode=pl.Buffered(3) here.)
                pl.BlockSpec((tm, DATA_DIM), lambda i: (i, 0)),
                # weights / biases: same block every step -> stay VMEM-resident.
                pl.BlockSpec((DATA_DIM, VP), lambda i: (0, 0)),
                pl.BlockSpec((1, VP), lambda i: (0, 0)),
                pl.BlockSpec((KP, NP), lambda i: (0, 0)),
                pl.BlockSpec((1, NP), lambda i: (0, 0)),
            ],
            out_specs=pl.BlockSpec((tm, NP), lambda i: (i, 0)),
        ),
        compiler_params=pltpu.CompilerParams(
            # "parallel" -> batch tiles sharded across v7x's 2 TensorCores.
            dimension_semantics=("parallel",),
            # Above v5e's 16 MiB scoped default so tile_m up to ~2048 compiles;
            # well under v6e/v7x limits.
            vmem_limit_bytes=32 * 1024 * 1024,
        ),
    )(data, w1_big, b1p, w2b, b2b)


def route2stop_reference(data, w1, b1, w2, b2):
    """Pure-JAX reference matching the PyTorch forward exactly (f32)."""
    D = data.shape[1]
    node1_idx = np.array(list(range(109, 209)) + [D + i for i in range(-10, -5)])
    node2_idx = np.array(list(range(209, 309)) + [D + i for i in range(-5, 0)])
    edge_idx = np.array(list(range(109)) + [D + i for i in range(-13, -10)])
    node1 = data[:, node1_idx]
    node2 = data[:, node2_idx]
    edge = data[:, edge_idx]
    e2v = jnp.maximum(edge @ w1 + b1, 0.0)
    v_i = jnp.maximum((node1 * e2v) @ w2 + b2, 0.0)
    v_j = jnp.maximum((node2 * e2v) @ w2 + b2, 0.0)
    return jnp.concatenate([v_i, v_j], axis=1)


if __name__ == "__main__":
    key = jax.random.PRNGKey(0)
    k1, k2, k3, k4, k5 = jax.random.split(key, 5)

    # Deterministic init mimicking nn.Linear's uniform(-1/sqrt(fan_in), ...).
    bound1 = 1.0 / np.sqrt(E)
    w1 = jax.random.uniform(k1, (E, V), jnp.float32, -bound1, bound1)
    b1 = jax.random.uniform(k2, (V,), jnp.float32, -bound1, bound1)
    bound2 = 1.0 / np.sqrt(V)
    w2 = jax.random.uniform(k3, (V, OUT), jnp.float32, -bound2, bound2)
    b2 = jax.random.uniform(k4, (OUT,), jnp.float32, -bound2, bound2)

    # Module-init-time param prep (padded + fused weights), done once.
    params = jax.tree.map(jax.block_until_ready, prepare_params(w1, b1, w2, b2))

    # Batch not a multiple of the tile -> exercises the ragged last block and
    # the two-grid-step (megacore) path.
    BATCH = 200
    data = jax.random.normal(k5, (BATCH, DATA_DIM), jnp.float32)

    ref = route2stop_reference(data, w1, b1, w2, b2)

    # f32 path: tight check against the reference forward.
    out = jax.block_until_ready(route2stop_pallas(data, *params))
    assert out.shape == (BATCH, NP)
    np.testing.assert_allclose(np.asarray(out[:, :2 * OUT]), np.asarray(ref),
                               rtol=1e-5, atol=1e-5)
    # padded output lanes are exactly zero by construction
    assert not np.any(np.asarray(out[:, 2 * OUT:]))

    # bf16 output (f32 accumulation/gate/ReLU): halves output writeback.
    out_bf16 = jax.block_until_ready(
        route2stop_pallas(data, *params, out_dtype=jnp.bfloat16))
    np.testing.assert_allclose(
        np.asarray(out_bf16[:, :2 * OUT].astype(jnp.float32)), np.asarray(ref),
        rtol=2e-2, atol=2e-2)

    print("KERNEL_OK")
</pallas_src>

<mosaic_0001>
module attributes {stable_mosaic.version = 11 : i64} {
  func.func @_route2stop_kernel(%arg0: i32, %arg1: memref<104x322xf32, #tpu.memory_space<vmem>>, %arg2: memref<322x128xf32, #tpu.memory_space<vmem>>, %arg3: memref<1x128xf32, #tpu.memory_space<vmem>>, %arg4: memref<256x128xf32, #tpu.memory_space<vmem>>, %arg5: memref<1x128xf32, #tpu.memory_space<vmem>>, %arg6: memref<104x128xf32, #tpu.memory_space<vmem>>) attributes {dimension_semantics = [#tpu.dimension_semantics<parallel>], iteration_bounds = array<i64: 2>, scalar_prefetch = 0 : i64, scratch_operands = 0 : i64, tpu.core_type = #tpu.core_type<tc>, window_params = [{transform_indices = @transform_0, window_bounds = array<i64: 104, 322>}, {pipeline_mode = #tpu.pipeline_mode<synchronous>, transform_indices = @transform_1, window_bounds = array<i64: 322, 128>}, {pipeline_mode = #tpu.pipeline_mode<synchronous>, transform_indices = @transform_2, window_bounds = array<i64: 1, 128>}, {pipeline_mode = #tpu.pipeline_mode<synchronous>, transform_indices = @transform_3, window_bounds = array<i64: 256, 128>}, {pipeline_mode = #tpu.pipeline_mode<synchronous>, transform_indices = @transform_4, window_bounds = array<i64: 1, 128>}, {transform_indices = @transform_5, window_bounds = array<i64: 104, 128>}]} {
    %c0 = arith.constant 0 : index
    %c0_0 = arith.constant 0 : index
    %0 = vector.load %arg1[%c0, %c0_0] : memref<104x322xf32, #tpu.memory_space<vmem>>, vector<104x322xf32>
    %c0_1 = arith.constant 0 : index
    %c0_2 = arith.constant 0 : index
    %1 = vector.load %arg2[%c0_1, %c0_2] : memref<322x128xf32, #tpu.memory_space<vmem>>, vector<322x128xf32>
    %cst = arith.constant dense<0.000000e+00> : vector<104x128xf32>
    %2 = tpu.matmul %0, %1, %cst {dimension_numbers = #tpu.dot_dimension_numbers<[1], [0], [0], [1], [0, 0, 1, 1], [], []>} : vector<104x322xf32>, vector<322x128xf32>, vector<104x128xf32> -> vector<104x128xf32>
    %c0_3 = arith.constant 0 : index
    %c0_4 = arith.constant 0 : index
    %3 = vector.load %arg3[%c0_3, %c0_4] : memref<1x128xf32, #tpu.memory_space<vmem>>, vector<1x128xf32>
    %4 = vector.broadcast %3 : vector<1x128xf32> to vector<104x128xf32>
    %5 = arith.addf %2, %4 : vector<104x128xf32>
    %cst_5 = arith.constant 0.000000e+00 : f32
    %6 = vector.broadcast %cst_5 : f32 to vector<104x128xf32>
    %7 = arith.maximumf %5, %6 : vector<104x128xf32>
    %cst_6 = arith.constant 0.000000e+00 : f32
    %8 = vector.broadcast %cst_6 : f32 to vector<104x23xf32>
    %9 = vector.extract_strided_slice %0 {offsets = [0, 109], sizes = [104, 100], strides = [1, 1]} : vector<104x322xf32> to vector<104x100xf32>
    %10 = vector.extract_strided_slice %0 {offsets = [0, 312], sizes = [104, 5], strides = [1, 1]} : vector<104x322xf32> to vector<104x5xf32>
    %11 = tpu.concatenate %9, %10, %8 in 1 : vector<104x100xf32>, vector<104x5xf32>, vector<104x23xf32> -> vector<104x128xf32>
    %12 = vector.extract_strided_slice %0 {offsets = [0, 209], sizes = [104, 100], strides = [1, 1]} : vector<104x322xf32> to vector<104x100xf32>
    %13 = vector.extract_strided_slice %0 {offsets = [0, 317], sizes = [104, 5], strides = [1, 1]} : vector<104x322xf32> to vector<104x5xf32>
    %14 = tpu.concatenate %12, %13, %8 in 1 : vector<104x100xf32>, vector<104x5xf32>, vector<104x23xf32> -> vector<104x128xf32>
    %15 = arith.mulf %11, %7 : vector<104x128xf32>
    %16 = arith.mulf %14, %7 : vector<104x128xf32>
    %17 = tpu.concatenate %15, %16 in 1 : vector<104x128xf32>, vector<104x128xf32> -> vector<104x256xf32>
    %c0_7 = arith.constant 0 : index
    %c0_8 = arith.constant 0 : index
    %18 = vector.load %arg4[%c0_7, %c0_8] : memref<256x128xf32, #tpu.memory_space<vmem>>, vector<256x128xf32>
    %cst_9 = arith.constant dense<0.000000e+00> : vector<104x128xf32>
    %19 = tpu.matmul %17, %18, %cst_9 {dimension_numbers = #tpu.dot_dimension_numbers<[1], [0], [0], [1], [0, 0, 1, 1], [], []>} : vector<104x256xf32>, vector<256x128xf32>, vector<104x128xf32> -> vector<104x128xf32>
    %c0_10 = arith.constant 0 : index
    %c0_11 = arith.constant 0 : index
    %20 = vector.load %arg5[%c0_10, %c0_11] : memref<1x128xf32, #tpu.memory_space<vmem>>, vector<1x128xf32>
    %21 = vector.broadcast %20 : vector<1x128xf32> to vector<104x128xf32>
    %22 = arith.addf %19, %21 : vector<104x128xf32>
    %cst_12 = arith.constant 0.000000e+00 : f32
    %23 = vector.broadcast %cst_12 : f32 to vector<104x128xf32>
    %24 = arith.maximumf %22, %23 : vector<104x128xf32>
    %c0_13 = arith.constant 0 : index
    %c0_14 = arith.constant 0 : index
    %25 = vector.load %arg6[%c0_13, %c0_14] : memref<104x128xf32, #tpu.memory_space<vmem>>, vector<104x128xf32>
    tpu.vector_store %arg6[%c0_13, %c0_14], %24 {strides = array<i32>} : memref<104x128xf32, #tpu.memory_space<vmem>>, vector<104x128xf32>,
    return
  }
  func.func @transform_0(%arg0: i32) -> (i32, i32) {
    %c0_i32 = arith.constant 0 : i32
    %c0_i32_0 = arith.constant 0 : i32
    return %arg0, %c0_i32 : i32, i32
  }
  func.func @transform_1(%arg0: i32) -> (i32, i32) {
    %c0_i32 = arith.constant 0 : i32
    %c0_i32_0 = arith.constant 0 : i32
    %c0_i32_1 = arith.constant 0 : i32
    return %c0_i32, %c0_i32_0 : i32, i32
  }
  func.func @transform_2(%arg0: i32) -> (i32, i32) {
    %c0_i32 = arith.constant 0 : i32
    %c0_i32_0 = arith.constant 0 : i32
    %c0_i32_1 = arith.constant 0 : i32
    return %c0_i32, %c0_i32_0 : i32, i32
  }
  func.func @transform_3(%arg0: i32) -> (i32, i32) {
    %c0_i32 = arith.constant 0 : i32
    %c0_i32_0 = arith.constant 0 : i32
    %c0_i32_1 = arith.constant 0 : i32
    return %c0_i32, %c0_i32_0 : i32, i32
  }
  func.func @transform_4(%arg0: i32) -> (i32, i32) {
    %c0_i32 = arith.constant 0 : i32
    %c0_i32_0 = arith.constant 0 : i32
    %c0_i32_1 = arith.constant 0 : i32
    return %c0_i32, %c0_i32_0 : i32, i32
  }
  func.func @transform_5(%arg0: i32) -> (i32, i32) {
    %c0_i32 = arith.constant 0 : i32
    %c0_i32_0 = arith.constant 0 : i32
    return %arg0, %c0_i32 : i32, i32
  }
}

</mosaic_0001>

<llo_original>
// kernel: route2stop_pallas.1
$region0: #{route2stop_pallas.1}
  #allocation0 [shape = 'u32[]', space=smem, size = 0x4, offset = 0x4, fixed_abs, tag = 'smem constant byte address 0x4 - core index']
  #allocation1 [shape = 'u32[144,128]{1,0:T(1,128)}', space=vmem, size = 0x12000, scoped, tag = 'internal scratch']
  %s0 = inlined_call_operand.hbm [shape: f32[200,322], index: 0, kind: input, shape index: {}]
  %s1 = inlined_call_operand.hbm [shape: f32[322,128], index: 1, kind: input, shape index: {}]
  %s2 = inlined_call_operand.vmem [shape: f32[1,128], index: 2, kind: input, shape index: {}]
  %s3 = inlined_call_operand.hbm [shape: f32[256,128], index: 3, kind: input, shape index: {}]
  %s4 = inlined_call_operand.vmem [shape: f32[1,128], index: 4, kind: input, shape index: {}]
  %s5 = inlined_call_operand.hbm [shape: f32[200,128], index: 5, kind: output, shape index: {}]
  %s6 = sld [smem:[#allocation0]]
  $region65: #{route2stop_pallas.1} parent=0
    _
  %s8 = ssub.s32 1, %s6
  %s9 = scalar_select 0, %s8, %s6
  $region1: #{route2stop_pallas.1} parent=0
    #allocation2 [shape = 'u8[319488]{0}', space=vmem, size = 0x4e000, scoped, tag = 'input window, operand 0']
    #allocation3 [shape = 's32[2]{0}', space=sflag, size = 0x8, scoped, tag = 'scoped memory for route2stop_pallas.1']
    #allocation4 [shape = 's32[2]{0}', space=sflag, size = 0x8, scoped, tag = 'scoped memory for route2stop_pallas.1']
    #allocation5 [shape = 'u8[167936]{0}', space=vmem, size = 0x29000, scoped, tag = 'input window, operand 1, single buffered']
    #allocation6 [shape = 's32[1]{0}', space=sflag, size = 0x4, scoped, tag = 'scoped memory for route2stop_pallas.1']
    #allocation7 [shape = 'u8[131072]{0}', space=vmem, size = 0x20000, scoped, tag = 'input window, operand 3, single buffered']
    #allocation8 [shape = 'u8[106496]{0}', space=vmem, size = 0x1a000, scoped, tag = 'output window, operand 0']
    %10 = vsyncpa [#allocation3], 0
    %s11 = scalar_lea.sflag [#allocation3], 1
    %12 = vsyncpa %s11, 0
    %13 = vsyncpa [#allocation6], 0
    %14 = vsyncpa [#allocation4], 0
    %s15 = scalar_lea.sflag [#allocation4], 1
    %16 = vsyncpa %s15, 0
    loop: start=0, step=1, limit=4
    $region2: #{route2stop_pallas.1} parent=1 // loop_pre_header
      _
    $region3: #{route2stop_pallas.1} parent=1 // loop_header
      %s18 = sphi 0, %s22
      %p19 = scmp.ge.s32.totalorder %s18, 4
      %s28 = sphi 0, %s30
      %s31 = sphi 0, %s28
      %s32 = sphi 0, %s31
      %s48 = sphi 0, %s32
      %s52 = sphi 0, %s52
      %s54 = sphi 0, %s52
      %s55 = sphi 0, %s54
      %s69 = sphi 0, %s55
      %s73 = sphi 0, %s73
      %s75 = sphi 0, %s73
      %s76 = sphi 0, %s75
      %s90 = sphi 0, %s76
      %s94 = sphi 0, %s94
      %s96 = sphi 0, %s94
      %s97 = sphi 0, %s96
      %s111 = sphi 0, %s97
      %s115 = sphi 0, %s115
      %s117 = sphi 0, %s115
      %s118 = sphi 0, %s117
      %s132 = sphi 0, %s118
      %s138 = sphi 0, %s140
      %s141 = sphi 0, %s138
      %s142 = sphi 0, %s141
      %s158 = sphi 0, %s142
    $region4: #{route2stop_pallas.1} parent=1 // loop_header_branch
      %21 = sbr.rel (%p19) target = $region8
    $region5: #{route2stop_pallas.1} parent=1 // loop_body
      %s23 = ssub.s32 %s18, 1
      %s24 = ssub.s32 %s18, 2
      %s25 = sadd.s32 %s18, 1
      %s26 = ssub.s32 %s18, %s25
      %p27 = scmp.eq.s32.totalorder %s26, 0
      %s29 = sadd.s32 %s28, 1
      %s30 = scalar_select %p27, %s28, %s29
      %p33 = pneg %p27
      %p34 = scmp.eq.s32.totalorder %s18, 1
      %p35 = por %p33, %p34
      %p36 = scmp.ne.s32.totalorder %s28, %s31
      %p37 = scmp.eq.s32.totalorder %s18, 0
      %p38 = por %p36, %p37
      %p39 = scmp.ne.s32.totalorder %s28, %s31
      %p40 = scmp.eq.s32.totalorder %s23, 1
      %p41 = por %p39, %p40
      %p42 = scmp.ne.s32.totalorder %s31, %s32
      %p43 = scmp.eq.s32.totalorder %s23, 0
      %p44 = por %p42, %p43
      %p45 = scmp.ne.s32.totalorder %s31, %s32
      %p46 = scmp.eq.s32.totalorder %s24, 1
      %p47 = por %p45, %p46
      %p49 = scmp.ne.s32.totalorder %s32, %s48
      %p50 = scmp.eq.s32.totalorder %s24, 0
      %p51 = por %p49, %p50
      %s53 = sadd.s32 %s52, 1
      %p56 = scmp.eq.s32.totalorder %s18, 1
      %p57 = scmp.ne.s32.totalorder %s52, %s54
      %p58 = scmp.eq.s32.totalorder %s18, 0
      %p59 = por %p57, %p58
      %p60 = scmp.ne.s32.totalorder %s52, %s54
      %p61 = scmp.eq.s32.totalorder %s23, 1
      %p62 = por %p60, %p61
      %p63 = scmp.ne.s32.totalorder %s54, %s55
      %p64 = scmp.eq.s32.totalorder %s23, 0
      %p65 = por %p63, %p64
      %p66 = scmp.ne.s32.totalorder %s54, %s55
      %p67 = scmp.eq.s32.totalorder %s24, 1
      %p68 = por %p66, %p67
      %p70 = scmp.ne.s32.totalorder %s55, %s69
      %p71 = scmp.eq.s32.totalorder %s24, 0
      %p72 = por %p70, %p71
      %s74 = sadd.s32 %s73, 1
      %p77 = scmp.eq.s32.totalorder %s18, 1
      %p78 = scmp.ne.s32.totalorder %s73, %s75
      %p79 = scmp.eq.s32.totalorder %s18, 0
      %p80 = por %p78, %p79
      %p81 = scmp.ne.s32.totalorder %s73, %s75
      %p82 = scmp.eq.s32.totalorder %s23, 1
      %p83 = por %p81, %p82
      %p84 = scmp.ne.s32.totalorder %s75, %s76
      %p85 = scmp.eq.s32.totalorder %s23, 0
      %p86 = por %p84, %p85
      %p87 = scmp.ne.s32.totalorder %s75, %s76
      %p88 = scmp.eq.s32.totalorder %s24, 1
      %p89 = por %p87, %p88
      %p91 = scmp.ne.s32.totalorder %s76, %s90
      %p92 = scmp.eq.s32.totalorder %s24, 0
      %p93 = por %p91, %p92
      %s95 = sadd.s32 %s94, 1
      %p98 = scmp.eq.s32.totalorder %s18, 1
      %p99 = scmp.ne.s32.totalorder %s94, %s96
      %p100 = scmp.eq.s32.totalorder %s18, 0
      %p101 = por %p99, %p100
      %p102 = scmp.ne.s32.totalorder %s94, %s96
      %p103 = scmp.eq.s32.totalorder %s23, 1
      %p104 = por %p102, %p103
      %p105 = scmp.ne.s32.totalorder %s96, %s97
      %p106 = scmp.eq.s32.totalorder %s23, 0
      %p107 = por %p105, %p106
      %p108 = scmp.ne.s32.totalorder %s96, %s97
      %p109 = scmp.eq.s32.totalorder %s24, 1
      %p110 = por %p108, %p109
      %p112 = scmp.ne.s32.totalorder %s97, %s111
      %p113 = scmp.eq.s32.totalorder %s24, 0
      %p114 = por %p112, %p113
      %s116 = sadd.s32 %s115, 1
      %p119 = scmp.eq.s32.totalorder %s18, 1
      %p120 = scmp.ne.s32.totalorder %s115, %s117
      %p121 = scmp.eq.s32.totalorder %s18, 0
      %p122 = por %p120, %p121
      %p123 = scmp.ne.s32.totalorder %s115, %s117
      %p124 = scmp.eq.s32.totalorder %s23, 1
      %p125 = por %p123, %p124
      %p126 = scmp.ne.s32.totalorder %s117, %s118
      %p127 = scmp.eq.s32.totalorder %s23, 0
      %p128 = por %p126, %p127
      %p129 = scmp.ne.s32.totalorder %s117, %s118
      %p130 = scmp.eq.s32.totalorder %s24, 1
      %p131 = por %p129, %p130
      %p133 = scmp.ne.s32.totalorder %s118, %s132
      %p134 = scmp.eq.s32.totalorder %s24, 0
      %p135 = por %p133, %p134
      %s136 = ssub.s32 %s18, %s25
      %p137 = scmp.eq.s32.totalorder %s136, 0
      %s139 = sadd.s32 %s138, 1
      %s140 = scalar_select %p137, %s138, %s139
      %p143 = pneg %p137
      %p144 = scmp.eq.s32.totalorder %s18, 1
      %p145 = por %p143, %p144
      %p146 = scmp.ne.s32.totalorder %s138, %s141
      %p147 = scmp.eq.s32.totalorder %s18, 0
      %p148 = por %p146, %p147
      %p149 = scmp.ne.s32.totalorder %s138, %s141
      %p150 = scmp.eq.s32.totalorder %s23, 1
      %p151 = por %p149, %p150
      %p152 = scmp.ne.s32.totalorder %s141, %s142
      %p153 = scmp.eq.s32.totalorder %s23, 0
      %p154 = por %p152, %p153
      %p155 = scmp.ne.s32.totalorder %s141, %s142
      %p156 = scmp.eq.s32.totalorder %s24, 1
      %p157 = por %p155, %p156
      %p159 = scmp.ne.s32.totalorder %s142, %s158
      %p160 = scmp.eq.s32.totalorder %s24, 0
      %p161 = por %p159, %p160
      %p162 = scmp.le.s32.totalorder 1, %s18
      %p163 = scmp.lt.s32.totalorder %s18, 3
      %p164 = pnand %p162, %p163
      %p165 = pneg %p164
      // Predicated region
      $region9: #{route2stop_pallas.1} parent=5 // pred_check
        _
      $region10: #{route2stop_pallas.1} parent=5 // pred_check_branch
        %167 = sbr.rel (%p164) target = $region12
      $region11: #{route2stop_pallas.1} parent=5 // pred_region
        %s168 = ssub.s32 %s18, 1
        // Predicated region
        $region13: #{route2stop_pallas.1} parent=11 // pred_check
          %p169 = pneg %p65
        $region14: #{route2stop_pallas.1} parent=11 // pred_check_branch
          %171 = sbr.rel (%p169) target = $region16
        $region15: #{route2stop_pallas.1} parent=11 // pred_region
          %s173 = ssub.s32 5248, 5248
          %174 = vsyncadd [#allocation6], %s173
          %s175 = sshll.u32 [#allocation5], 4
          %s176 = int_to_ptr.vmem [resolvable:$true] %s175
          %181 = dma.hbm_to_vmem [thread:$0]  %s1, 5248, %s176, [#allocation6], 128, 128, 8
        $region16: #{route2stop_pallas.1} parent=11 // pred_fallthru
          _
        // Predicated region
        $region17: #{route2stop_pallas.1} parent=11 // pred_check
          %p182 = pneg %p86
        $region18: #{route2stop_pallas.1} parent=11 // pred_check_branch
          %184 = sbr.rel (%p182) target = $region20
        $region19: #{route2stop_pallas.1} parent=11 // pred_region
          _
        $region20: #{route2stop_pallas.1} parent=11 // pred_fallthru
          _
        // Predicated region
        $region21: #{route2stop_pallas.1} parent=11 // pred_check
          %p185 = pneg %p107
        $region22: #{route2stop_pallas.1} parent=11 // pred_check_branch
          %187 = sbr.rel (%p185) target = $region24
        $region23: #{route2stop_pallas.1} parent=11 // pred_region
          %s189 = ssub.s32 4096, 4096
          %190 = vsyncadd [#allocation6], %s189
          %s191 = sshll.u32 [#allocation7], 4
          %s192 = int_to_ptr.vmem [resolvable:$true] %s191
          %197 = dma.hbm_to_vmem [thread:$0]  %s3, 4096, %s192, [#allocation6], 128, 128, 8
        $region24: #{route2stop_pallas.1} parent=11 // pred_fallthru
          _
        // Predicated region
        $region25: #{route2stop_pallas.1} parent=11 // pred_check
          %p198 = pneg %p128
        $region26: #{route2stop_pallas.1} parent=11 // pred_check_branch
          %200 = sbr.rel (%p198) target = $region28
        $region27: #{route2stop_pallas.1} parent=11 // pred_region
          _
        $region28: #{route2stop_pallas.1} parent=11 // pred_fallthru
          _
      $region12: #{route2stop_pallas.1} parent=5 // pred_fallthru
        _
      %p201 = scmp.lt.s32.totalorder %s18, 2
      // Predicated region
      $region29: #{route2stop_pallas.1} parent=5 // pred_check
        %p202 = pneg %p201
      $region30: #{route2stop_pallas.1} parent=5 // pred_check_branch
        %204 = sbr.rel (%p202) target = $region32
      $region31: #{route2stop_pallas.1} parent=5 // pred_region
        // Predicated region
        $region33: #{route2stop_pallas.1} parent=31 // pred_check
          %p205 = pneg %p38
        $region34: #{route2stop_pallas.1} parent=31 // pred_check_branch
          %207 = sbr.rel (%p205) target = $region36
        $region35: #{route2stop_pallas.1} parent=31 // pred_region
          %s208 = sand.u32 %s28, 1
          %s209 = scalar_lea.sflag [#allocation3], %s208
          %s210 = sand.u32 %s28, 1
          %s211 = smul.addr %s210, 312
          %s212 = scalar_lea.vmem [#allocation2], %s211
          %s213 = smul.u32 13, %s18
          %s214 = ssub.s32 25, %s213
          %p215 = scmp.lt.s32.totalorder %s214, 13
          %s216 = scalar_select %p215, %s214, 13
          %s217 = smul.u32 128, %s216
          %s218 = smul.u32 %s217, 3
          %s220 = ssub.s32 4992, %s218
          %221 = vsyncadd %s209, %s220
          %p222 = scmp.ne.s32.totalorder 0, %s218
          %s223 = smul.addr %s213, 3
          %s224 = smul.addr %s223, 128
          %s225 = scalar_lea.hbm %s0, %s224
          %s226 = smul.u32 24, %s216
          %s227 = sshll.u32 %s212, 4
          %s228 = int_to_ptr.vmem [resolvable:$true] %s227
          %s229 = sshll.u32 %s226, 4
          %233 = dma.hbm_to_vmem [thread:$0]  (%p222), %s225, %s229, %s228, %s209, 384, 384, 24
        $region36: #{route2stop_pallas.1} parent=31 // pred_fallthru
          _
      $region32: #{route2stop_pallas.1} parent=5 // pred_fallthru
        _
      %p234 = scmp.le.s32.totalorder 1, %s18
      %p235 = scmp.lt.s32.totalorder %s18, 3
      %p236 = pnand %p234, %p235
      %p237 = pneg %p236
      // Predicated region
      $region37: #{route2stop_pallas.1} parent=5 // pred_check
        _
      $region38: #{route2stop_pallas.1} parent=5 // pred_check_branch
        %239 = sbr.rel (%p236) target = $region40
      $region39: #{route2stop_pallas.1} parent=5 // pred_region
        %s240 = ssub.s32 %s18, 1
        %s241 = sand.u32 %s31, 1
        %s242 = scalar_lea.sflag [#allocation3], %s241
        %s243 = sand.u32 %s31, 1
        %s244 = smul.addr %s243, 312
        %s245 = scalar_lea.vmem [#allocation2], %s244
        // Predicated region
        $region41: #{route2stop_pallas.1} parent=39 // pred_check
          %p246 = pneg %p44
        $region42: #{route2stop_pallas.1} parent=39 // pred_check_branch
          %248 = sbr.rel (%p246) target = $region44
        $region43: #{route2stop_pallas.1} parent=39 // pred_region
          %249 = dma.done %s242, 4992
        $region44: #{route2stop_pallas.1} parent=39 // pred_fallthru
          _
        // Predicated region
        $region45: #{route2stop_pallas.1} parent=39 // pred_check
          %p250 = pneg %p65
        $region46: #{route2stop_pallas.1} parent=39 // pred_check_branch
          %252 = sbr.rel (%p250) target = $region48
        $region47: #{route2stop_pallas.1} parent=39 // pred_region
          %253 = dma.done [#allocation6], 5248
        $region48: #{route2stop_pallas.1} parent=39 // pred_fallthru
          _
        // Predicated region
        $region49: #{route2stop_pallas.1} parent=39 // pred_check
          %p254 = pneg %p107
        $region50: #{route2stop_pallas.1} parent=39 // pred_check_branch
          %256 = sbr.rel (%p254) target = $region52
        $region51: #{route2stop_pallas.1} parent=39 // pred_region
          %257 = dma.done [#allocation6], 4096
        $region52: #{route2stop_pallas.1} parent=39 // pred_fallthru
          _
        %s258 = sand.u32 %s31, 1
        %s259 = scalar_lea.sflag [#allocation3], %s258
        %s260 = sand.u32 %s31, 1
        %s261 = smul.addr %s260, 312
        %s262 = scalar_lea.vmem [#allocation2], %s261
        %p263 = pneg %p44
        %p264 = pneg %p41
        %p265 = pneg %p65
        %p266 = pneg %p62
        %p267 = pneg %p86
        %p268 = pneg %p83
        %p269 = pneg %p107
        %p270 = pneg %p104
        %p271 = pneg %p128
        %p272 = pneg %p125
        %p273 = pneg %p154
        %p274 = pneg %p151
        %s275 = sand.u32 %s141, 1
        %s276 = scalar_lea.sflag [#allocation4], %s275
        %s277 = sand.u32 %s141, 1
        %s278 = smul.addr %s277, 104
        %s279 = scalar_lea.vmem [#allocation8], %s278
        %s280 = smul.u32 13, %s23
        %s281 = ssub.s32 25, %s280
        %p282 = scmp.lt.s32.totalorder %s281, 13
        %s283 = scalar_select %p282, %s281, 13
        %s284 = smul.u32 128, %s283
        %s285 = smul.u32 %s284, 3
        %s286 = smul.u32 13, %s23
        %s287 = ssub.s32 25, %s286
        %p288 = scmp.lt.s32.totalorder %s287, 13
        %s289 = scalar_select %p288, %s287, 13
        %s290 = smul.u32 128, %s289
        %v291 = vld [vmem:[%s245] sm:$0xff]
        %v292 = vld [vmem:[%s245 + $0x8] sm:$0xff]
        %v293 = vld [vmem:[%s245 + $0x10] sm:$0xff]
        %v294 = vld [vmem:[%s245 + $0x18] sm:$0xff]
        %v295 = vld [vmem:[%s245 + $0x20] sm:$0xff]
        %v296 = vld [vmem:[%s245 + $0x28] sm:$0xff]
        %v297 = vld [vmem:[%s245 + $0x30] sm:$0xff]
        %v298 = vld [vmem:[%s245 + $0x38] sm:$0xff]
        %v299 = vld [vmem:[%s245 + $0x40] sm:$0xff]
        %v300 = vld [vmem:[%s245 + $0x48] sm:$0xff]
        %v301 = vld [vmem:[%s245 + $0x50] sm:$0xff]
        %v302 = vld [vmem:[%s245 + $0x58] sm:$0xff]
        %v303 = vld [vmem:[%s245 + $0x60] sm:$0xff]
        %v304 = vld [vmem:[%s245 + $0x68] sm:$0xff]
        %v305 = vld [vmem:[%s245 + $0x70] sm:$0xff]
        %v306 = vld [vmem:[%s245 + $0x78] sm:$0xff]
        %v307 = vld [vmem:[%s245 + $0x80] sm:$0xff]
        %v308 = vld [vmem:[%s245 + $0x88] sm:$0xff]
        %v309 = vld [vmem:[%s245 + $0x90] sm:$0xff]
        %v310 = vld [vmem:[%s245 + $0x98] sm:$0xff]
        %v311 = vld [vmem:[%s245 + $0xa0] sm:$0xff]
        %v312 = vld [vmem:[%s245 + $0xa8] sm:$0xff]
        %v313 = vld [vmem:[%s245 + $0xb0] sm:$0xff]
        %v314 = vld [vmem:[%s245 + $0xb8] sm:$0xff]
        %v315 = vld [vmem:[%s245 + $0xc0] sm:$0xff]
        %v316 = vld [vmem:[%s245 + $0xc8] sm:$0xff]
        %v317 = vld [vmem:[%s245 + $0xd0] sm:$0xff]
        %v318 = vld [vmem:[%s245 + $0xd8] sm:$0xff]
        %v319 = vld [vmem:[%s245 + $0xe0] sm:$0xff]
        %v320 = vld [vmem:[%s245 + $0xe8] sm:$0xff]
        %v321 = vld [vmem:[%s245 + $0xf0] sm:$0xff]
        %v322 = vld [vmem:[%s245 + $0xf8] sm:$0xff]
        %v323 = vld [vmem:[%s245 + $0x100] sm:$0xff]
        %v324 = vld [vmem:[%s245 + $0x108] sm:$0xff]
        %v325 = vld [vmem:[%s245 + $0x110] sm:$0xff]
        %v326 = vld [vmem:[%s245 + $0x118] sm:$0xff]
        %v327 = vld [vmem:[%s245 + $0x120] sm:$0xff]
        %v328 = vld [vmem:[%s245 + $0x128] sm:$0xff]
        %v329 = vld [vmem:[%s245 + $0x130] sm:$0xff]
        %v330 = vld [vmem:[#allocation5] sm:$0xff]
        %v331 = vld [vmem:[#allocation5 + $0x8] sm:$0xff]
        %v332 = vld [vmem:[#allocation5 + $0x10] sm:$0xff]
        %v333 = vld [vmem:[#allocation5 + $0x18] sm:$0xff]
        %v334 = vld [vmem:[#allocation5 + $0x20] sm:$0xff]
        %v335 = vld [vmem:[#allocation5 + $0x28] sm:$0xff]
        %v336 = vld [vmem:[#allocation5 + $0x30] sm:$0xff]
        %v337 = vld [vmem:[#allocation5 + $0x38] sm:$0xff]
        %v338 = vld [vmem:[#allocation5 + $0x40] sm:$0xff]
        %v339 = vld [vmem:[#allocation5 + $0x48] sm:$0xff]
        %v340 = vld [vmem:[#allocation5 + $0x50] sm:$0xff]
        %v341 = vld [vmem:[#allocation5 + $0x58] sm:$0xff]
        %v342 = vld [vmem:[#allocation5 + $0x60] sm:$0xff]
        %v343 = vld [vmem:[#allocation5 + $0x68] sm:$0xff]
        %v344 = vld [vmem:[#allocation5 + $0x70] sm:$0xff]
        %v345 = vld [vmem:[#allocation5 + $0x78] sm:$0xff]
        %v346 = vld [vmem:[#allocation5 + $0x80] sm:$0xff]
        %v347 = vld [vmem:[#allocation5 + $0x88] sm:$0xff]
        %v348 = vld [vmem:[#allocation5 + $0x90] sm:$0xff]
        %v349 = vld [vmem:[#allocation5 + $0x98] sm:$0xff]
        %v350 = vld [vmem:[#allocation5 + $0xa0] sm:$0xff]
        %v351 = vld [vmem:[#allocation5 + $0xa8] sm:$0xff]
        %v352 = vld [vmem:[#allocation5 + $0xb0] sm:$0xff]
        %v353 = vld [vmem:[#allocation5 + $0xb8] sm:$0xff]
        %v354 = vld [vmem:[#allocation5 + $0xc0] sm:$0xff]
        %v355 = vld [vmem:[#allocation5 + $0xc8] sm:$0xff]
        %v356 = vld [vmem:[#allocation5 + $0xd0] sm:$0xff]
        %v357 = vld [vmem:[#allocation5 + $0xd8] sm:$0xff]
        %v358 = vld [vmem:[#allocation5 + $0xe0] sm:$0xff]
        %v359 = vld [vmem:[#allocation5 + $0xe8] sm:$0xff]
        %v360 = vld [vmem:[#allocation5 + $0xf0] sm:$0xff]
        %v361 = vld [vmem:[#allocation5 + $0xf8] sm:$0xff]
        %v362 = vld [vmem:[#allocation5 + $0x100] sm:$0xff]
        %v363 = vld [vmem:[#allocation5 + $0x108] sm:$0xff]
        %v364 = vld [vmem:[#allocation5 + $0x110] sm:$0xff]
        %v365 = vld [vmem:[#allocation5 + $0x118] sm:$0xff]
        %v366 = vld [vmem:[#allocation5 + $0x120] sm:$0xff]
        %v367 = vld [vmem:[#allocation5 + $0x128] sm:$0xff]
        %v368 = vld [vmem:[#allocation5 + $0x130] sm:$0xff]
        %v369 = vld [vmem:[#allocation5 + $0x138] sm:$0xff]
        %v370 = vld [vmem:[#allocation5 + $0x140] sm:$0x3]
        %v371 = vld [vmem:[%s2] sm:$0x1]
        %v373 = vlaneseq
        %v374 = vshrl.u32 %v373, 7
        %v375 = vsub.s32 0, %v374
        %v376 = vrot.slane %v371, %v375
        %vm378 = vcmask 539648
        %v380 = vsel %vm378, %v293, 0
        %v383 = vsel %vm378, %v296, 0
        %v386 = vsel %vm378, %v299, 0
        %v389 = vsel %vm378, %v302, 0
        %v392 = vsel %vm378, %v305, 0
        %v395 = vsel %vm378, %v308, 0
        %v398 = vsel %vm378, %v311, 0
        %v401 = vsel %vm378, %v314, 0
        %v404 = vsel %vm378, %v317, 0
        %v407 = vsel %vm378, %v320, 0
        %v410 = vsel %vm378, %v323, 0
        %v413 = vsel %vm378, %v326, 0
        %v416 = vsel %vm378, %v329, 0
        %vm418 = vcmask 1041408
        %v420 = vsel %vm418, %v370, 0
        %422 = vmatprep.subr.mxu0 0.0
        %423 = vmatpush1.msra.mxu0 %v330
        %424 = vmatprep.subr.mxu0 0.0
        %425 = vmatpush1.msra.mxu0 %v331
        %426 = vmatprep.subr.mxu0 0.0
        %427 = vmatpush1.msra.mxu0 %v332
        %428 = vmatprep.subr.mxu0 0.0
        %429 = vmatpush1.msra.mxu0 %v333
        %430 = vmatprep.subr.mxu0 0.0
        %431 = vmatpush1.msra.mxu0 %v334
        %432 = vmatprep.subr.mxu0 0.0
        %433 = vmatpush1.msra.mxu0 %v335
        %434 = vmatprep.subr.mxu0 0.0
        %435 = vmatpush1.msra.mxu0 %v336
        %436 = vmatprep.subr.mxu0 0.0
        %437 = vmatpush1.msra.mxu0 %v337
        %438 = vmatprep.subr.mxu0 0.0
        %439 = vmatpush1.msra.mxu0 %v338
        %440 = vmatprep.subr.mxu0 0.0
        %441 = vmatpush1.msra.mxu0 %v339
        %442 = vmatprep.subr.mxu0 0.0
        %443 = vmatpush1.msra.mxu0 %v340
        %444 = vmatprep.subr.mxu0 0.0
        %445 = vmatpush1.msra.mxu0 %v341
        %446 = vmatprep.subr.mxu0 0.0
        %447 = vmatpush1.msra.mxu0 %v342
        %448 = vmatprep.subr.mxu0 0.0
        %449 = vmatpush1.msra.mxu0 %v343
        %450 = vmatprep.subr.mxu0 0.0
        %451 = vmatpush1.msra.mxu0 %v344
        %452 = vmatprep.subr.mxu0 0.0
        %453 = vmatpush1.msra.mxu0 %v345
        %454 = vmatprep.subr.mxu0 0.0
        %455 = vmatpush1.msra.mxu0 %v346
        %456 = vmatprep.subr.mxu0 0.0
        %457 = vmatpush1.msra.mxu0 %v347
        %458 = vmatprep.subr.mxu0 0.0
        %459 = vmatpush1.msra.mxu0 %v348
        %460 = vmatprep.subr.mxu0 0.0
        %461 = vmatpush1.msra.mxu0 %v349
        %462 = vmatprep.subr.mxu0 0.0
        %463 = vmatpush1.msra.mxu0 %v350
        %464 = vmatprep.subr.mxu0 0.0
        %465 = vmatpush1.msra.mxu0 %v351
        %466 = vmatprep.subr.mxu0 0.0
        %467 = vmatpush1.msra.mxu0 %v352
        %468 = vmatprep.subr.mxu0 0.0
        %469 = vmatpush1.msra.mxu0 %v353
        %470 = vmatprep.subr.mxu0 0.0
        %471 = vmatpush1.msra.mxu0 %v354
        %472 = vmatprep.subr.mxu0 0.0
        %473 = vmatpush1.msra.mxu0 %v355
        %474 = vmatprep.subr.mxu0 0.0
        %475 = vmatpush1.msra.mxu0 %v356
        %476 = vmatprep.subr.mxu0 0.0
        %477 = vmatpush1.msra.mxu0 %v357
        %478 = vmatprep.subr.mxu0 0.0
        %479 = vmatpush1.msra.mxu0 %v358
        %480 = vmatprep.subr.mxu0 0.0
        %481 = vmatpush1.msra.mxu0 %v359
        %482 = vmatprep.subr.mxu0 0.0
        %483 = vmatpush1.msra.mxu0 %v360
        %484 = vmatprep.subr.mxu0 0.0
        %485 = vmatpush1.msra.mxu0 %v361
        %486 = vmatprep.mubr.f32.mxu0 %v292
        %487 = vmatmul.mubr.f32.gmra.mrb[0].mxu0 %v291
        %v488 = vpop.f32.mrb[0].mxu0
        %v489 = vadd.f32 %v376, %v488
        %v490 = vpop.f32.mrb[0].mxu0
        %491 = vmatprep.mubr.f32.mxu0 %v295
        %492 = vmatmul.mubr.f32.gmra.mrb[0].mxu0 %v294
        %v493 = vpop.f32.mrb[0].mxu0
        %v494 = vadd.f32 %v376, %v493
        %v495 = vpop.f32.mrb[0].mxu0
        %496 = vmatprep.mubr.f32.mxu0 %v298
        %497 = vmatmul.mubr.f32.gmra.mrb[0].mxu0 %v297
        %v498 = vpop.f32.mrb[0].mxu0
        %v499 = vadd.f32 %v376, %v498
        %v500 = vpop.f32.mrb[0].mxu0
        %501 = vmatprep.mubr.f32.mxu0 %v301
        %502 = vmatmul.mubr.f32.gmra.mrb[0].mxu0 %v300
        %v503 = vpop.f32.mrb[0].mxu0
        %v504 = vadd.f32 %v376, %v503
        %v505 = vpop.f32.mrb[0].mxu0
        %506 = vmatprep.mubr.f32.mxu0 %v304
        %507 = vmatmul.mubr.f32.gmra.mrb[0].mxu0 %v303
        %v508 = vpop.f32.mrb[0].mxu0
        %v509 = vadd.f32 %v376, %v508
        %v510 = vpop.f32.mrb[0].mxu0
        %511 = vmatprep.mubr.f32.mxu0 %v307
        %512 = vmatmul.mubr.f32.gmra.mrb[0].mxu0 %v306
        %v513 = vpop.f32.mrb[0].mxu0
        %v514 = vadd.f32 %v376, %v513
        %v515 = vpop.f32.mrb[0].mxu0
        %516 = vmatprep.mubr.f32.mxu0 %v310
        %517 = vmatmul.mubr.f32.gmra.mrb[0].mxu0 %v309
        %v518 = vpop.f32.mrb[0].mxu0
        %v519 = vadd.f32 %v376, %v518
        %v520 = vpop.f32.mrb[0].mxu0
        %521 = vmatprep.mubr.f32.mxu0 %v313
        %522 = vmatmul.mubr.f32.gmra.mrb[0].mxu0 %v312
        %v523 = vpop.f32.mrb[0].mxu0
        %v524 = vadd.f32 %v376, %v523
        %v525 = vpop.f32.mrb[0].mxu0
        %526 = vmatprep.mubr.f32.mxu0 %v316
        %527 = vmatmul.mubr.f32.gmra.mrb[0].mxu0 %v315
        %v528 = vpop.f32.mrb[0].mxu0
        %v529 = vadd.f32 %v376, %v528
        %v530 = vpop.f32.mrb[0].mxu0
        %531 = vmatprep.mubr.f32.mxu0 %v319
        %532 = vmatmul.mubr.f32.gmra.mrb[0].mxu0 %v318
        %v533 = vpop.f32.mrb[0].mxu0
        %v534 = vadd.f32 %v376, %v533
        %v535 = vpop.f32.mrb[0].mxu0
        %536 = vmatprep.mubr.f32.mxu0 %v322
        %537 = vmatmul.mubr.f32.gmra.mrb[0].mxu0 %v321
        %v538 = vpop.f32.mrb[0].mxu0
        %v539 = vadd.f32 %v376, %v538
        %v540 = vpop.f32.mrb[0].mxu0
        %541 = vmatprep.mubr.f32.mxu0 %v325
        %542 = vmatmul.mubr.f32.gmra.mrb[0].mxu0 %v324
        %v543 = vpop.f32.mrb[0].mxu0
        %v544 = vadd.f32 %v376, %v543
        %v545 = vpop.f32.mrb[0].mxu0
        %546 = vmatprep.mubr.f32.mxu0 %v328
        %547 = vmatmul.mubr.f32.gmra.mrb[0].mxu0 %v327
        %v548 = vpop.f32.mrb[0].mxu0
        %v549 = vadd.f32 %v376, %v548
        %v550 = vpop.f32.mrb[0].mxu0
        %551 = vdwg.mxu0
        %552 = vmatprep.subr.mxu0 0.0
        %553 = vmatpush1.msra.mxu0 %v362
        %554 = vmatprep.subr.mxu0 0.0
        %555 = vmatpush1.msra.mxu0 %v363
        %556 = vmatprep.subr.mxu0 0.0
        %557 = vmatpush1.msra.mxu0 %v364
        %558 = vmatprep.subr.mxu0 0.0
        %559 = vmatpush1.msra.mxu0 %v365
        %560 = vmatprep.subr.mxu0 0.0
        %561 = vmatpush1.msra.mxu0 %v366
        %562 = vmatprep.subr.mxu0 0.0
        %563 = vmatpush1.msra.mxu0 %v367
        %564 = vmatprep.subr.mxu0 0.0
        %565 = vmatpush1.msra.mxu0 %v368
        %566 = vmatprep.subr.mxu0 0.0
        %567 = vmatpush1.msra.mxu0 %v369
        %568 = vmatprep.subr.mxu0 0.0
        %569 = vmatpush1.msra.mxu0 %v420
        %570 = vmatprep.subr.mxu0 0.0
        %571 = vmatpush1.msra.mxu0 0.0
        %572 = vmatprep.subr.mxu0 0.0
        %573 = vmatpush1.msra.mxu0 0.0
        %574 = vmatprep.subr.mxu0 0.0
        %575 = vmatpush1.msra.mxu0 0.0
        %576 = vmatprep.subr.mxu0 0.0
        %577 = vmatpush1.msra.mxu0 0.0
        %578 = vmatprep.subr.mxu0 0.0
        %579 = vmatpush1.msra.mxu0 0.0
        %580 = vmatprep.subr.mxu0 0.0
        %581 = vmatpush1.msra.mxu0 0.0
        %582 = vmatprep.subr.mxu0 0.0
        %583 = vmatpush1.msra.mxu0 0.0
        %584 = vmatprep.subr.mxu0 0.0
        %585 = vmatpush1.msra.mxu0 0.0
        %586 = vmatprep.subr.mxu0 0.0
        %587 = vmatpush1.msra.mxu0 0.0
        %588 = vmatprep.subr.mxu0 0.0
        %589 = vmatpush1.msra.mxu0 0.0
        %590 = vmatprep.subr.mxu0 0.0
        %591 = vmatpush1.msra.mxu0 0.0
        %592 = vmatprep.subr.mxu0 0.0
        %593 = vmatpush1.msra.mxu0 0.0
        %594 = vmatprep.subr.mxu0 0.0
        %595 = vmatpush1.msra.mxu0 0.0
        %596 = vmatprep.subr.mxu0 0.0
        %597 = vmatpush1.msra.mxu0 0.0
        %598 = vmatprep.subr.mxu0 0.0
        %599 = vmatpush1.msra.mxu0 0.0
        %600 = vmatprep.subr.mxu0 0.0
        %601 = vmatpush1.msra.mxu0 0.0
        %602 = vmatprep.subr.mxu0 0.0
        %603 = vmatpush1.msra.mxu0 0.0
        %604 = vmatprep.subr.mxu0 0.0
        %605 = vmatpush1.msra.mxu0 0.0
        %606 = vmatprep.subr.mxu0 0.0
        %607 = vmatpush1.msra.mxu0 0.0
        %608 = vmatprep.subr.mxu0 0.0
        %609 = vmatpush1.msra.mxu0 0.0
        %610 = vmatprep.subr.mxu0 0.0
        %611 = vmatpush1.msra.mxu0 0.0
        %612 = vmatprep.subr.mxu0 0.0
        %613 = vmatpush1.msra.mxu0 0.0
        %614 = vmatprep.subr.mxu0 0.0
        %615 = vmatpush1.msra.mxu0 0.0
        %616 = vmatprep.mubr.f32.mxu0 0.0
        %617 = vmatmul.mubr.f32.gmra.mrb[0].mxu0 %v380
        %v618 = vpop.f32.mrb[0].mxu0
        %v619 = vadd.f32 %v489, %v618
        %v620 = vpop.f32.mrb[0].mxu0
        %621 = vmatprep.mubr.f32.mxu0 0.0
        %622 = vmatmul.mubr.f32.gmra.mrb[0].mxu0 %v383
        %v623 = vpop.f32.mrb[0].mxu0
        %v624 = vadd.f32 %v494, %v623
        %v625 = vpop.f32.mrb[0].mxu0
        %626 = vmatprep.mubr.f32.mxu0 0.0
        %627 = vmatmul.mubr.f32.gmra.mrb[0].mxu0 %v386
        %v628 = vpop.f32.mrb[0].mxu0
        %v629 = vadd.f32 %v499, %v628
        %v630 = vpop.f32.mrb[0].mxu0
        %631 = vmatprep.mubr.f32.mxu0 0.0
        %632 = vmatmul.mubr.f32.gmra.mrb[0].mxu0 %v389
        %v633 = vpop.f32.mrb[0].mxu0
        %v634 = vadd.f32 %v504, %v633
        %v635 = vpop.f32.mrb[0].mxu0
        %636 = vmatprep.mubr.f32.mxu0 0.0
        %637 = vmatmul.mubr.f32.gmra.mrb[0].mxu0 %v392
        %v638 = vpop.f32.mrb[0].mxu0
        %v639 = vadd.f32 %v509, %v638
        %v640 = vpop.f32.mrb[0].mxu0
        %641 = vmatprep.mubr.f32.mxu0 0.0
        %642 = vmatmul.mubr.f32.gmra.mrb[0].mxu0 %v395
        %v643 = vpop.f32.mrb[0].mxu0
        %v644 = vadd.f32 %v514, %v643
        %v645 = vpop.f32.mrb[0].mxu0
        %646 = vmatprep.mubr.f32.mxu0 0.0
        %647 = vmatmul.mubr.f32.gmra.mrb[0].mxu0 %v398
        %v648 = vpop.f32.mrb[0].mxu0
        %v649 = vadd.f32 %v519, %v648
        %v650 = vpop.f32.mrb[0].mxu0
        %651 = vmatprep.mubr.f32.mxu0 0.0
        %652 = vmatmul.mubr.f32.gmra.mrb[0].mxu0 %v401
        %v653 = vpop.f32.mrb[0].mxu0
        %v654 = vadd.f32 %v524, %v653
        %v655 = vpop.f32.mrb[0].mxu0
        %656 = vmatprep.mubr.f32.mxu0 0.0
        %657 = vmatmul.mubr.f32.gmra.mrb[0].mxu0 %v404
        %v658 = vpop.f32.mrb[0].mxu0
        %v659 = vadd.f32 %v529, %v658
        %v660 = vpop.f32.mrb[0].mxu0
        %661 = vmatprep.mubr.f32.mxu0 0.0
        %662 = vmatmul.mubr.f32.gmra.mrb[0].mxu0 %v407
        %v663 = vpop.f32.mrb[0].mxu0
        %v664 = vadd.f32 %v534, %v663
        %v665 = vpop.f32.mrb[0].mxu0
        %666 = vmatprep.mubr.f32.mxu0 0.0
        %667 = vmatmul.mubr.f32.gmra.mrb[0].mxu0 %v410
        %v668 = vpop.f32.mrb[0].mxu0
        %v669 = vadd.f32 %v539, %v668
        %v670 = vpop.f32.mrb[0].mxu0
        %671 = vmatprep.mubr.f32.mxu0 0.0
        %672 = vmatmul.mubr.f32.gmra.mrb[0].mxu0 %v413
        %v673 = vpop.f32.mrb[0].mxu0
        %v674 = vadd.f32 %v544, %v673
        %v675 = vpop.f32.mrb[0].mxu0
        %676 = vmatprep.mubr.f32.mxu0 0.0
        %677 = vmatmul.mubr.f32.gmra.mrb[0].mxu0 %v416
        %v678 = vpop.f32.mrb[0].mxu0
        %v679 = vadd.f32 %v549, %v678
        %v680 = vpop.f32.mrb[0].mxu0
        %681 = vdwg.mxu0
        %v682 = vmax.f32 %v619, 0.0
        %v683 = vmax.f32 %v624, 0.0
        %v684 = vmax.f32 %v629, 0.0
        %v685 = vmax.f32 %v634, 0.0
        %v686 = vmax.f32 %v639, 0.0
        %v687 = vmax.f32 %v644, 0.0
        %v688 = vmax.f32 %v649, 0.0
        %v689 = vmax.f32 %v654, 0.0
        %v690 = vmax.f32 %v659, 0.0
        %v691 = vmax.f32 %v664, 0.0
        %v692 = vmax.f32 %v669, 0.0
        %v693 = vmax.f32 %v674, 0.0
        %v694 = vmax.f32 %v679, 0.0
        %721 = vrot.lane.b32.xlu0 %v291, 19
        %v722 = vpop.permute.xlu0 %721
        %723 = vrot.lane.b32.xlu0 %v292, 19
        %v724 = vpop.permute.xlu0 %723
        %725 = vrot.lane.b32.xlu0 %v294, 19
        %v726 = vpop.permute.xlu0 %725
        %727 = vrot.lane.b32.xlu0 %v295, 19
        %v728 = vpop.permute.xlu0 %727
        %729 = vrot.lane.b32.xlu0 %v297, 19
        %v730 = vpop.permute.xlu0 %729
        %731 = vrot.lane.b32.xlu0 %v298, 19
        %v732 = vpop.permute.xlu0 %731
        %733 = vrot.lane.b32.xlu0 %v300, 19
        %v734 = vpop.permute.xlu0 %733
        %735 = vrot.lane.b32.xlu0 %v301, 19
        %v736 = vpop.permute.xlu0 %735
        %737 = vrot.lane.b32.xlu0 %v303, 19
        %v738 = vpop.permute.xlu0 %737
        %739 = vrot.lane.b32.xlu0 %v304, 19
        %v740 = vpop.permute.xlu0 %739
        %741 = vrot.lane.b32.xlu0 %v306, 19
        %v742 = vpop.permute.xlu0 %741
        %743 = vrot.lane.b32.xlu0 %v307, 19
        %v744 = vpop.permute.xlu0 %743
        %745 = vrot.lane.b32.xlu0 %v309, 19
        %v746 = vpop.permute.xlu0 %745
        %747 = vrot.lane.b32.xlu0 %v310, 19
        %v748 = vpop.permute.xlu0 %747
        %749 = vrot.lane.b32.xlu0 %v312, 19
        %v750 = vpop.permute.xlu0 %749
        %751 = vrot.lane.b32.xlu0 %v313, 19
        %v752 = vpop.permute.xlu0 %751
        %753 = vrot.lane.b32.xlu0 %v315, 19
        %v754 = vpop.permute.xlu0 %753
        %755 = vrot.lane.b32.xlu0 %v316, 19
        %v756 = vpop.permute.xlu0 %755
        %757 = vrot.lane.b32.xlu0 %v318, 19
        %v758 = vpop.permute.xlu0 %757
        %759 = vrot.lane.b32.xlu0 %v319, 19
        %v760 = vpop.permute.xlu0 %759
        %761 = vrot.lane.b32.xlu0 %v321, 19
        %v762 = vpop.permute.xlu0 %761
        %763 = vrot.lane.b32.xlu0 %v322, 19
        %v764 = vpop.permute.xlu0 %763
        %765 = vrot.lane.b32.xlu0 %v324, 19
        %v766 = vpop.permute.xlu0 %765
        %767 = vrot.lane.b32.xlu0 %v325, 19
        %v768 = vpop.permute.xlu0 %767
        %769 = vrot.lane.b32.xlu0 %v327, 19
        %v770 = vpop.permute.xlu0 %769
        %771 = vrot.lane.b32.xlu0 %v328, 19
        %v772 = vpop.permute.xlu0 %771
        %vm773 = vcmask 154624
        %v774 = vsel %vm773, %v722, %v724
        %v775 = vsel %vm773, %v726, %v728
        %v776 = vsel %vm773, %v730, %v732
        %v777 = vsel %vm773, %v734, %v736
        %v778 = vsel %vm773, %v738, %v740
        %v779 = vsel %vm773, %v742, %v744
        %v780 = vsel %vm773, %v746, %v748
        %v781 = vsel %vm773, %v750, %v752
        %v782 = vsel %vm773, %v754, %v756
        %v783 = vsel %vm773, %v758, %v760
        %v784 = vsel %vm773, %v762, %v764
        %v785 = vsel %vm773, %v766, %v768
        %v786 = vsel %vm773, %v770, %v772
        %800 = vrot.lane.b32.xlu0 %v293, 44
        %v801 = vpop.permute.xlu0 %800
        %802 = vrot.lane.b32.xlu0 %v296, 44
        %v803 = vpop.permute.xlu0 %802
        %804 = vrot.lane.b32.xlu0 %v299, 44
        %v805 = vpop.permute.xlu0 %804
        %806 = vrot.lane.b32.xlu0 %v302, 44
        %v807 = vpop.permute.xlu0 %806
        %808 = vrot.lane.b32.xlu0 %v305, 44
        %v809 = vpop.permute.xlu0 %808
        %810 = vrot.lane.b32.xlu0 %v308, 44
        %v811 = vpop.permute.xlu0 %810
        %812 = vrot.lane.b32.xlu0 %v311, 44
        %v813 = vpop.permute.xlu0 %812
        %814 = vrot.lane.b32.xlu0 %v314, 44
        %v815 = vpop.permute.xlu0 %814
        %816 = vrot.lane.b32.xlu0 %v317, 44
        %v817 = vpop.permute.xlu0 %816
        %818 = vrot.lane.b32.xlu0 %v320, 44
        %v819 = vpop.permute.xlu0 %818
        %820 = vrot.lane.b32.xlu0 %v323, 44
        %v821 = vpop.permute.xlu0 %820
        %822 = vrot.lane.b32.xlu0 %v326, 44
        %v823 = vpop.permute.xlu0 %822
        %824 = vrot.lane.b32.xlu0 %v329, 44
        %v825 = vpop.permute.xlu0 %824
        %vm839 = vcmask 818176
        %v840 = vsel %vm839, %v774, %v801
        %v841 = vsel %vm839, %v775, %v803
        %v842 = vsel %vm839, %v776, %v805
        %v843 = vsel %vm839, %v777, %v807
        %v844 = vsel %vm839, %v778, %v809
        %v845 = vsel %vm839, %v779, %v811
        %v846 = vsel %vm839, %v780, %v813
        %v847 = vsel %vm839, %v781, %v815
        %v848 = vsel %vm839, %v782, %v817
        %v849 = vsel %vm839, %v783, %v819
        %v850 = vsel %vm839, %v784, %v821
        %v851 = vsel %vm839, %v785, %v823
        %v852 = vsel %vm839, %v786, %v825
        %vm853 = vcmask 859136
        %v854 = vsel %vm853, %v840, 0.0
        %v855 = vsel %vm853, %v841, 0.0
        %v856 = vsel %vm853, %v842, 0.0
        %v857 = vsel %vm853, %v843, 0.0
        %v858 = vsel %vm853, %v844, 0.0
        %v859 = vsel %vm853, %v845, 0.0
        %v860 = vsel %vm853, %v846, 0.0
        %v861 = vsel %vm853, %v847, 0.0
        %v862 = vsel %vm853, %v848, 0.0
        %v863 = vsel %vm853, %v849, 0.0
        %v864 = vsel %vm853, %v850, 0.0
        %v865 = vsel %vm853, %v851, 0.0
        %v866 = vsel %vm853, %v852, 0.0
        %867 = vrot.lane.b32.xlu0 %v292, 47
        %v868 = vpop.permute.xlu0 %867
        %869 = vrot.lane.b32.xlu0 %v293, 47
        %v870 = vpop.permute.xlu0 %869
        %871 = vrot.lane.b32.xlu0 %v295, 47
        %v872 = vpop.permute.xlu0 %871
        %873 = vrot.lane.b32.xlu0 %v296, 47
        %v874 = vpop.permute.xlu0 %873
        %875 = vrot.lane.b32.xlu0 %v298, 47
        %v876 = vpop.permute.xlu0 %875
        %877 = vrot.lane.b32.xlu0 %v299, 47
        %v878 = vpop.permute.xlu0 %877
        %879 = vrot.lane.b32.xlu0 %v301, 47
        %v880 = vpop.permute.xlu0 %879
        %881 = vrot.lane.b32.xlu0 %v302, 47
        %v882 = vpop.permute.xlu0 %881
        %883 = vrot.lane.b32.xlu0 %v304, 47
        %v884 = vpop.permute.xlu0 %883
        %885 = vrot.lane.b32.xlu0 %v305, 47
        %v886 = vpop.permute.xlu0 %885
        %887 = vrot.lane.b32.xlu0 %v307, 47
        %v888 = vpop.permute.xlu0 %887
        %889 = vrot.lane.b32.xlu0 %v308, 47
        %v890 = vpop.permute.xlu0 %889
        %891 = vrot.lane.b32.xlu0 %v310, 47
        %v892 = vpop.permute.xlu0 %891
        %893 = vrot.lane.b32.xlu0 %v311, 47
        %v894 = vpop.permute.xlu0 %893
        %895 = vrot.lane.b32.xlu0 %v313, 47
        %v896 = vpop.permute.xlu0 %895
        %897 = vrot.lane.b32.xlu0 %v314, 47
        %v898 = vpop.permute.xlu0 %897
        %899 = vrot.lane.b32.xlu0 %v316, 47
        %v900 = vpop.permute.xlu0 %899
        %901 = vrot.lane.b32.xlu0 %v317, 47
        %v902 = vpop.permute.xlu0 %901
        %903 = vrot.lane.b32.xlu0 %v319, 47
        %v904 = vpop.permute.xlu0 %903
        %905 = vrot.lane.b32.xlu0 %v320, 47
        %v906 = vpop.permute.xlu0 %905
        %907 = vrot.lane.b32.xlu0 %v322, 47
        %v908 = vpop.permute.xlu0 %907
        %909 = vrot.lane.b32.xlu0 %v323, 47
        %v910 = vpop.permute.xlu0 %909
        %911 = vrot.lane.b32.xlu0 %v325, 47
        %v912 = vpop.permute.xlu0 %911
        %913 = vrot.lane.b32.xlu0 %v326, 47
        %v914 = vpop.permute.xlu0 %913
        %915 = vrot.lane.b32.xlu0 %v328, 47
        %v916 = vpop.permute.xlu0 %915
        %917 = vrot.lane.b32.xlu0 %v329, 47
        %v918 = vpop.permute.xlu0 %917
        %vm919 = vcmask 384000
        %v920 = vsel %vm919, %v868, %v870
        %v921 = vsel %vm919, %v872, %v874
        %v922 = vsel %vm919, %v876, %v878
        %v923 = vsel %vm919, %v880, %v882
        %v924 = vsel %vm919, %v884, %v886
        %v925 = vsel %vm919, %v888, %v890
        %v926 = vsel %vm919, %v892, %v894
        %v927 = vsel %vm919, %v896, %v898
        %v928 = vsel %vm919, %v900, %v902
        %v929 = vsel %vm919, %v904, %v906
        %v930 = vsel %vm919, %v908, %v910
        %v931 = vsel %vm919, %v912, %v914
        %v932 = vsel %vm919, %v916, %v918
        %946 = vrot.lane.b32.xlu0 %v293, 39
        %v947 = vpop.permute.xlu0 %946
        %948 = vrot.lane.b32.xlu0 %v296, 39
        %v949 = vpop.permute.xlu0 %948
        %950 = vrot.lane.b32.xlu0 %v299, 39
        %v951 = vpop.permute.xlu0 %950
        %952 = vrot.lane.b32.xlu0 %v302, 39
        %v953 = vpop.permute.xlu0 %952
        %954 = vrot.lane.b32.xlu0 %v305, 39
        %v955 = vpop.permute.xlu0 %954
        %956 = vrot.lane.b32.xlu0 %v308, 39
        %v957 = vpop.permute.xlu0 %956
        %958 = vrot.lane.b32.xlu0 %v311, 39
        %v959 = vpop.permute.xlu0 %958
        %960 = vrot.lane.b32.xlu0 %v314, 39
        %v961 = vpop.permute.xlu0 %960
        %962 = vrot.lane.b32.xlu0 %v317, 39
        %v963 = vpop.permute.xlu0 %962
        %964 = vrot.lane.b32.xlu0 %v320, 39
        %v965 = vpop.permute.xlu0 %964
        %966 = vrot.lane.b32.xlu0 %v323, 39
        %v967 = vpop.permute.xlu0 %966
        %968 = vrot.lane.b32.xlu0 %v326, 39
        %v969 = vpop.permute.xlu0 %968
        %970 = vrot.lane.b32.xlu0 %v329, 39
        %v971 = vpop.permute.xlu0 %970
        %v985 = vsel %vm839, %v920, %v947
        %v986 = vsel %vm839, %v921, %v949
        %v987 = vsel %vm839, %v922, %v951
        %v988 = vsel %vm839, %v923, %v953
        %v989 = vsel %vm839, %v924, %v955
        %v990 = vsel %vm839, %v925, %v957
        %v991 = vsel %vm839, %v926, %v959
        %v992 = vsel %vm839, %v927, %v961
        %v993 = vsel %vm839, %v928, %v963
        %v994 = vsel %vm839, %v929, %v965
        %v995 = vsel %vm839, %v930, %v967
        %v996 = vsel %vm839, %v931, %v969
        %v997 = vsel %vm839, %v932, %v971
        %v998 = vsel %vm853, %v985, 0.0
        %v999 = vsel %vm853, %v986, 0.0
        %v1000 = vsel %vm853, %v987, 0.0
        %v1001 = vsel %vm853, %v988, 0.0
        %v1002 = vsel %vm853, %v989, 0.0
        %v1003 = vsel %vm853, %v990, 0.0
        %v1004 = vsel %vm853, %v991, 0.0
        %v1005 = vsel %vm853, %v992, 0.0
        %v1006 = vsel %vm853, %v993, 0.0
        %v1007 = vsel %vm853, %v994, 0.0
        %v1008 = vsel %vm853, %v995, 0.0
        %v1009 = vsel %vm853, %v996, 0.0
        %v1010 = vsel %vm853, %v997, 0.0
        %v1011 = vmul.f32 %v854, %v682
        %v1012 = vmul.f32 %v855, %v683
        %v1013 = vmul.f32 %v856, %v684
        %v1014 = vmul.f32 %v857, %v685
        %v1015 = vmul.f32 %v858, %v686
        %v1016 = vmul.f32 %v859, %v687
        %v1017 = vmul.f32 %v860, %v688
        %v1018 = vmul.f32 %v861, %v689
        %v1019 = vmul.f32 %v862, %v690
        %v1020 = vmul.f32 %v863, %v691
        %v1021 = vmul.f32 %v864, %v692
        %v1022 = vmul.f32 %v865, %v693
        %v1023 = vmul.f32 %v866, %v694
        %v1024 = vmul.f32 %v998, %v682
        %v1025 = vmul.f32 %v999, %v683
        %v1026 = vmul.f32 %v1000, %v684
        %v1027 = vmul.f32 %v1001, %v685
        %v1028 = vmul.f32 %v1002, %v686
        %v1029 = vmul.f32 %v1003, %v687
        %v1030 = vmul.f32 %v1004, %v688
        %v1031 = vmul.f32 %v1005, %v689
        %v1032 = vmul.f32 %v1006, %v690
        %v1033 = vmul.f32 %v1007, %v691
        %v1034 = vmul.f32 %v1008, %v692
        %v1035 = vmul.f32 %v1009, %v693
        %v1036 = vmul.f32 %v1010, %v694
        %v1037 = vld [vmem:[#allocation7] sm:$0xff]
        %v1038 = vld [vmem:[#allocation7 + $0x8] sm:$0xff]
        %v1039 = vld [vmem:[#allocation7 + $0x10] sm:$0xff]
        %v1040 = vld [vmem:[#allocation7 + $0x18] sm:$0xff]
        %v1041 = vld [vmem:[#allocation7 + $0x20] sm:$0xff]
        %v1042 = vld [vmem:[#allocation7 + $0x28] sm:$0xff]
        %v1043 = vld [vmem:[#allocation7 + $0x30] sm:$0xff]
        %v1044 = vld [vmem:[#allocation7 + $0x38] sm:$0xff]
        %v1045 = vld [vmem:[#allocation7 + $0x40] sm:$0xff]
        %v1046 = vld [vmem:[#allocation7 + $0x48] sm:$0xff]
        %v1047 = vld [vmem:[#allocation7 + $0x50] sm:$0xff]
        %v1048 = vld [vmem:[#allocation7 + $0x58] sm:$0xff]
        %v1049 = vld [vmem:[#allocation7 + $0x60] sm:$0xff]
        %v1050 = vld [vmem:[#allocation7 + $0x68] sm:$0xff]
        %v1051 = vld [vmem:[#allocation7 + $0x70] sm:$0xff]
        %v1052 = vld [vmem:[#allocation7 + $0x78] sm:$0xff]
        %v1053 = vld [vmem:[#allocation7 + $0x80] sm:$0xff]
        %v1054 = vld [vmem:[#allocation7 + $0x88] sm:$0xff]
        %v1055 = vld [vmem:[#allocation7 + $0x90] sm:$0xff]
        %v1056 = vld [vmem:[#allocation7 + $0x98] sm:$0xff]
        %v1057 = vld [vmem:[#allocation7 + $0xa0] sm:$0xff]
        %v1058 = vld [vmem:[#allocation7 + $0xa8] sm:$0xff]
        %v1059 = vld [vmem:[#allocation7 + $0xb0] sm:$0xff]
        %v1060 = vld [vmem:[#allocation7 + $0xb8] sm:$0xff]
        %v1061 = vld [vmem:[#allocation7 + $0xc0] sm:$0xff]
        %v1062 = vld [vmem:[#allocation7 + $0xc8] sm:$0xff]
        %v1063 = vld [vmem:[#allocation7 + $0xd0] sm:$0xff]
        %v1064 = vld [vmem:[#allocation7 + $0xd8] sm:$0xff]
        %v1065 = vld [vmem:[#allocation7 + $0xe0] sm:$0xff]
        %v1066 = vld [vmem:[#allocation7 + $0xe8] sm:$0xff]
        %v1067 = vld [vmem:[#allocation7 + $0xf0] sm:$0xff]
        %v1068 = vld [vmem:[#allocation7 + $0xf8] sm:$0xff]
        %v1069 = vld [vmem:[%s4] sm:$0x1]
        %v1071 = vlaneseq
        %v1072 = vshrl.u32 %v1071, 7
        %v1073 = vsub.s32 0, %v1072
        %v1074 = vrot.slane %v1069, %v1073
        %1076 = vmatprep.subr.mxu0 0.0
        %1077 = vmatpush1.msra.mxu0 %v1037
        %1078 = vmatprep.subr.mxu0 0.0
        %1079 = vmatpush1.msra.mxu0 %v1038
        %1080 = vmatprep.subr.mxu0 0.0
        %1081 = vmatpush1.msra.mxu0 %v1039
        %1082 = vmatprep.subr.mxu0 0.0
        %1083 = vmatpush1.msra.mxu0 %v1040
        %1084 = vmatprep.subr.mxu0 0.0
        %1085 = vmatpush1.msra.mxu0 %v1041
        %1086 = vmatprep.subr.mxu0 0.0
        %1087 = vmatpush1.msra.mxu0 %v1042
        %1088 = vmatprep.subr.mxu0 0.0
        %1089 = vmatpush1.msra.mxu0 %v1043
        %1090 = vmatprep.subr.mxu0 0.0
        %1091 = vmatpush1.msra.mxu0 %v1044
        %1092 = vmatprep.subr.mxu0 0.0
        %1093 = vmatpush1.msra.mxu0 %v1045
        %1094 = vmatprep.subr.mxu0 0.0
        %1095 = vmatpush1.msra.mxu0 %v1046
        %1096 = vmatprep.subr.mxu0 0.0
        %1097 = vmatpush1.msra.mxu0 %v1047
        %1098 = vmatprep.subr.mxu0 0.0
        %1099 = vmatpush1.msra.mxu0 %v1048
        %1100 = vmatprep.subr.mxu0 0.0
        %1101 = vmatpush1.msra.mxu0 %v1049
        %1102 = vmatprep.subr.mxu0 0.0
        %1103 = vmatpush1.msra.mxu0 %v1050
        %1104 = vmatprep.subr.mxu0 0.0
        %1105 = vmatpush1.msra.mxu0 %v1051
        %1106 = vmatprep.subr.mxu0 0.0
        %1107 = vmatpush1.msra.mxu0 %v1052
        %1108 = vmatprep.subr.mxu0 0.0
        %1109 = vmatpush1.msra.mxu0 %v1053
        %1110 = vmatprep.subr.mxu0 0.0
        %1111 = vmatpush1.msra.mxu0 %v1054
        %1112 = vmatprep.subr.mxu0 0.0
        %1113 = vmatpush1.msra.mxu0 %v1055
        %1114 = vmatprep.subr.mxu0 0.0
        %1115 = vmatpush1.msra.mxu0 %v1056
        %1116 = vmatprep.subr.mxu0 0.0
        %1117 = vmatpush1.msra.mxu0 %v1057
        %1118 = vmatprep.subr.mxu0 0.0
        %1119 = vmatpush1.msra.mxu0 %v1058
        %1120 = vmatprep.subr.mxu0 0.0
        %1121 = vmatpush1.msra.mxu0 %v1059
        %1122 = vmatprep.subr.mxu0 0.0
        %1123 = vmatpush1.msra.mxu0 %v1060
        %1124 = vmatprep.subr.mxu0 0.0
        %1125 = vmatpush1.msra.mxu0 %v1061
        %1126 = vmatprep.subr.mxu0 0.0
        %1127 = vmatpush1.msra.mxu0 %v1062
        %1128 = vmatprep.subr.mxu0 0.0
        %1129 = vmatpush1.msra.mxu0 %v1063
        %1130 = vmatprep.subr.mxu0 0.0
        %1131 = vmatpush1.msra.mxu0 %v1064
        %1132 = vmatprep.subr.mxu0 0.0
        %1133 = vmatpush1.msra.mxu0 %v1065
        %1134 = vmatprep.subr.mxu0 0.0
        %1135 = vmatpush1.msra.mxu0 %v1066
        %1136 = vmatprep.subr.mxu0 0.0
        %1137 = vmatpush1.msra.mxu0 %v1067
        %1138 = vmatprep.subr.mxu0 0.0
        %1139 = vmatpush1.msra.mxu0 %v1068
        %1140 = vmatprep.mubr.f32.mxu0 %v1024
        %1141 = vmatmul.mubr.f32.gmra.mrb[0].mxu0 %v1011
        %v1142 = vpop.f32.mrb[0].mxu0
        %v1143 = vadd.f32 %v1074, %v1142
        %v1144 = vpop.f32.mrb[0].mxu0
        %1145 = vmatprep.mubr.f32.mxu0 %v1025
        %1146 = vmatmul.mubr.f32.gmra.mrb[0].mxu0 %v1012
        %v1147 = vpop.f32.mrb[0].mxu0
        %v1148 = vadd.f32 %v1074, %v1147
        %v1149 = vpop.f32.mrb[0].mxu0
        %1150 = vmatprep.mubr.f32.mxu0 %v1026
        %1151 = vmatmul.mubr.f32.gmra.mrb[0].mxu0 %v1013
        %v1152 = vpop.f32.mrb[0].mxu0
        %v1153 = vadd.f32 %v1074, %v1152
        %v1154 = vpop.f32.mrb[0].mxu0
        %1155 = vmatprep.mubr.f32.mxu0 %v1027
        %1156 = vmatmul.mubr.f32.gmra.mrb[0].mxu0 %v1014
        %v1157 = vpop.f32.mrb[0].mxu0
        %v1158 = vadd.f32 %v1074, %v1157
        %v1159 = vpop.f32.mrb[0].mxu0
        %1160 = vmatprep.mubr.f32.mxu0 %v1028
        %1161 = vmatmul.mubr.f32.gmra.mrb[0].mxu0 %v1015
        %v1162 = vpop.f32.mrb[0].mxu0
        %v1163 = vadd.f32 %v1074, %v1162
        %v1164 = vpop.f32.mrb[0].mxu0
        %1165 = vmatprep.mubr.f32.mxu0 %v1029
        %1166 = vmatmul.mubr.f32.gmra.mrb[0].mxu0 %v1016
        %v1167 = vpop.f32.mrb[0].mxu0
        %v1168 = vadd.f32 %v1074, %v1167
        %v1169 = vpop.f32.mrb[0].mxu0
        %1170 = vmatprep.mubr.f32.mxu0 %v1030
        %1171 = vmatmul.mubr.f32.gmra.mrb[0].mxu0 %v1017
        %v1172 = vpop.f32.mrb[0].mxu0
        %v1173 = vadd.f32 %v1074, %v1172
        %v1174 = vpop.f32.mrb[0].mxu0
        %1175 = vmatprep.mubr.f32.mxu0 %v1031
        %1176 = vmatmul.mubr.f32.gmra.mrb[0].mxu0 %v1018
        %v1177 = vpop.f32.mrb[0].mxu0
        %v1178 = vadd.f32 %v1074, %v1177
        %v1179 = vpop.f32.mrb[0].mxu0
        %1180 = vmatprep.mubr.f32.mxu0 %v1032
        %1181 = vmatmul.mubr.f32.gmra.mrb[0].mxu0 %v1019
        %v1182 = vpop.f32.mrb[0].mxu0
        %v1183 = vadd.f32 %v1074, %v1182
        %v1184 = vpop.f32.mrb[0].mxu0
        %1185 = vmatprep.mubr.f32.mxu0 %v1033
        %1186 = vmatmul.mubr.f32.gmra.mrb[0].mxu0 %v1020
        %v1187 = vpop.f32.mrb[0].mxu0
        %v1188 = vadd.f32 %v1074, %v1187
        %v1189 = vpop.f32.mrb[0].mxu0
        %1190 = vmatprep.mubr.f32.mxu0 %v1034
        %1191 = vmatmul.mubr.f32.gmra.mrb[0].mxu0 %v1021
        %v1192 = vpop.f32.mrb[0].mxu0
        %v1193 = vadd.f32 %v1074, %v1192
        %v1194 = vpop.f32.mrb[0].mxu0
        %1195 = vmatprep.mubr.f32.mxu0 %v1035
        %1196 = vmatmul.mubr.f32.gmra.mrb[0].mxu0 %v1022
        %v1197 = vpop.f32.mrb[0].mxu0
        %v1198 = vadd.f32 %v1074, %v1197
        %v1199 = vpop.f32.mrb[0].mxu0
        %1200 = vmatprep.mubr.f32.mxu0 %v1036
        %1201 = vmatmul.mubr.f32.gmra.mrb[0].mxu0 %v1023
        %v1202 = vpop.f32.mrb[0].mxu0
        %v1203 = vadd.f32 %v1074, %v1202
        %v1204 = vpop.f32.mrb[0].mxu0
        %1205 = vdwg.mxu0
        %v1206 = vmax.f32 %v1143, 0.0
        %v1207 = vmax.f32 %v1148, 0.0
        %v1208 = vmax.f32 %v1153, 0.0
        %v1209 = vmax.f32 %v1158, 0.0
        %v1210 = vmax.f32 %v1163, 0.0
        %v1211 = vmax.f32 %v1168, 0.0
        %v1212 = vmax.f32 %v1173, 0.0
        %v1213 = vmax.f32 %v1178, 0.0
        %v1214 = vmax.f32 %v1183, 0.0
        %v1215 = vmax.f32 %v1188, 0.0
        %v1216 = vmax.f32 %v1193, 0.0
        %v1217 = vmax.f32 %v1198, 0.0
        %v1218 = vmax.f32 %v1203, 0.0
        %1219 = vst [vmem:[%s279] sm:$0xff] %v1206
        %1220 = vst [vmem:[%s279 + $0x8] sm:$0xff] %v1207
        %1221 = vst [vmem:[%s279 + $0x10] sm:$0xff] %v1208
        %1222 = vst [vmem:[%s279 + $0x18] sm:$0xff] %v1209
        %1223 = vst [vmem:[%s279 + $0x20] sm:$0xff] %v1210
        %1224 = vst [vmem:[%s279 + $0x28] sm:$0xff] %v1211
        %1225 = vst [vmem:[%s279 + $0x30] sm:$0xff] %v1212
        %1226 = vst [vmem:[%s279 + $0x38] sm:$0xff] %v1213
        %1227 = vst [vmem:[%s279 + $0x40] sm:$0xff] %v1214
        %1228 = vst [vmem:[%s279 + $0x48] sm:$0xff] %v1215
        %1229 = vst [vmem:[%s279 + $0x50] sm:$0xff] %v1216
        %1230 = vst [vmem:[%s279 + $0x58] sm:$0xff] %v1217
        %1231 = vst [vmem:[%s279 + $0x60] sm:$0xff] %v1218
        %s1232 = sand.u32 %s141, 1
        %s1233 = scalar_lea.sflag [#allocation4], %s1232
        %s1234 = sand.u32 %s141, 1
        %s1235 = smul.addr %s1234, 104
        %s1236 = scalar_lea.vmem [#allocation8], %s1235
        // Predicated region
        $region53: #{route2stop_pallas.1} parent=39 // pred_check
          %p1237 = pneg %p151
        $region54: #{route2stop_pallas.1} parent=39 // pred_check_branch
          %1239 = sbr.rel (%p1237) target = $region56
        $region55: #{route2stop_pallas.1} parent=39 // pred_region
          %s1240 = smul.u32 13, %s23
          %s1241 = ssub.s32 25, %s1240
          %p1242 = scmp.lt.s32.totalorder %s1241, 13
          %s1243 = scalar_select %p1242, %s1241, 13
          %s1244 = smul.u32 128, %s1243
          %s1246 = ssub.s32 1664, %s1244
          %1247 = vsyncadd %s1233, %s1246
          %p1248 = scmp.ne.s32.totalorder 0, %s1244
          %s1249 = smul.addr %s1240, 128
          %s1250 = scalar_lea.hbm %s5, %s1249
          %s1251 = smul.u32 8, %s1243
          %s1252 = sshll.u32 %s1236, 4
          %s1253 = int_to_ptr.vmem [resolvable:$true] %s1252
          %s1254 = sshll.u32 %s1251, 4
          %1258 = dma.vmem_to_hbm [thread:$0]  (%p1248), %s1253, %s1254, %s1250, %s1233, 128, 128, 8
        $region56: #{route2stop_pallas.1} parent=39 // pred_fallthru
          _
      $region40: #{route2stop_pallas.1} parent=5 // pred_fallthru
        _
      %p1259 = scmp.le.s32.totalorder 2, %s18
      // Predicated region
      $region57: #{route2stop_pallas.1} parent=5 // pred_check
        %p1260 = pneg %p1259
      $region58: #{route2stop_pallas.1} parent=5 // pred_check_branch
        %1262 = sbr.rel (%p1260) target = $region60
      $region59: #{route2stop_pallas.1} parent=5 // pred_region
        %s1263 = ssub.s32 %s18, 2
        // Predicated region
        $region61: #{route2stop_pallas.1} parent=59 // pred_check
          %p1264 = pneg %p157
        $region62: #{route2stop_pallas.1} parent=59 // pred_check_branch
          %1266 = sbr.rel (%p1264) target = $region64
        $region63: #{route2stop_pallas.1} parent=59 // pred_region
          %s1267 = sand.u32 %s142, 1
          %s1268 = scalar_lea.sflag [#allocation4], %s1267
          %s1269 = sand.u32 %s142, 1
          %s1270 = smul.addr %s1269, 104
          %s1271 = scalar_lea.vmem [#allocation8], %s1270
          %1272 = dma.done %s1268, 1664
        $region64: #{route2stop_pallas.1} parent=59 // pred_fallthru
          _
      $region60: #{route2stop_pallas.1} parent=5 // pred_fallthru
        _
    $region6: #{route2stop_pallas.1} parent=1 // loop_footer
      %s22 = sadd.s32 1, %s18
    $region7: #{route2stop_pallas.1} parent=1 // loop_footer_branch
      %17 = sbr.rel target = $region3
    $region8: #{route2stop_pallas.1} parent=1 // loop_exit
      _
    %1273 = vsyncpa [#allocation3], 1
    %s1274 = scalar_lea.sflag [#allocation3], 1
    %1275 = vsyncpa %s1274, 1
    %1276 = vsyncpa [#allocation6], 1
    %1277 = vsyncpa [#allocation4], 1
    %s1278 = scalar_lea.sflag [#allocation4], 1
    %1279 = vsyncpa %s1278, 1

</llo_original>
